<compile_context>
chip_gen: v5e
topology: v5e:2x2
jax: 0.10.0
libtpu: 0.0.40
codegen_flags: <defaults>
</compile_context>

<pallas_src>
import jax
import jax.numpy as jnp
import numpy as np
from jax.experimental import pallas as pl
from jax.experimental.pallas import tpu as pltpu

EPS = 1e-5


# --------------------------------------------------------------------------
# Pallas kernels
# --------------------------------------------------------------------------
def conv1_stats_kernel(ap_ref, wb_ref, y_ref, stats_ref):
    """3x3 'same' conv as ONE banded matmul (3 row taps concatenated along K)
    plus per-row-tile [sum, sumsq] partial stats for BatchNorm.

    ap_ref    : (1, H+2, W*C)  bf16  H-padded input slab, resident per image
    wb_ref    : (3*W*C, W*F)   bf16  banded weights, W boundary baked in
    y_ref     : (1, TH, W*F)   bf16  pre-BN conv output tile
    stats_ref : (1, 1, 2, W*F) f32   per-tile [sum, sumsq] partials
    """
    t = pl.program_id(1)
    th = y_ref.shape[1]
    row0 = pl.multiple_of(t * th, th)

    # One (TH+2)-row halo window load; widen to f32 once so the three shifted
    # views below are cheap unpacked sublane slices.
    win = ap_ref[0, pl.ds(row0, th + 2), :].astype(jnp.float32)     # (TH+2, W*C)
    lhs = jnp.concatenate([win[0:th], win[1:th + 1], win[2:th + 2]], axis=-1)
    acc = jnp.dot(lhs.astype(jnp.bfloat16), wb_ref[...],
                  preferred_element_type=jnp.float32)               # (TH, W*F)

    y_ref[0] = acc.astype(y_ref.dtype)
    s = jnp.sum(acc, axis=0, keepdims=True)
    ss = jnp.sum(acc * acc, axis=0, keepdims=True)
    stats_ref[0, 0] = jnp.concatenate([s, ss], axis=0)              # single store


def conv2_fused_kernel(y1_ref, sc_ref, sh_ref, wb_ref, y_ref, stats_ref, apad_ref):
    """conv2 with BN1 + ReLU + H zero-padding fused into its prologue.

    y1_ref    : (1, H, W*F)    bf16  pre-BN conv1 output, resident per image
    sc_ref/sh_ref : (1, W*F)   f32   BN1 per-lane scale / shift
    wb_ref    : (3*W*F, W*F)   bf16  banded conv2 weights
    y_ref     : (1, TH, W*F)   bf16  pre-BN conv2 output tile
    stats_ref : (1, 1, 2, W*F) f32   per-tile [sum, sumsq] partials
    apad_ref  : VMEM (H+2, W*F) f32  BN1+ReLU'd, H-padded activation (per image)
    """
    t = pl.program_id(1)
    th = y_ref.shape[1]

    @pl.when(t == 0)
    def _prologue():  # once per image: BN1 + ReLU + zero H halo, kept in VMEM
        a = jnp.maximum(y1_ref[0].astype(jnp.float32) * sc_ref[...] + sh_ref[...], 0.0)
        zrow = jnp.zeros((1, a.shape[1]), jnp.float32)
        apad_ref[...] = jnp.concatenate([zrow, a, zrow], axis=0)

    row0 = pl.multiple_of(t * th, th)
    win = apad_ref[pl.ds(row0, th + 2), :]                          # (TH+2, W*F) f32
    lhs = jnp.concatenate([win[0:th], win[1:th + 1], win[2:th + 2]], axis=-1)
    acc = jnp.dot(lhs.astype(jnp.bfloat16), wb_ref[...],
                  preferred_element_type=jnp.float32)               # (TH, W*F)

    y_ref[0] = acc.astype(y_ref.dtype)
    s = jnp.sum(acc, axis=0, keepdims=True)
    ss = jnp.sum(acc * acc, axis=0, keepdims=True)
    stats_ref[0, 0] = jnp.concatenate([s, ss], axis=0)


# --------------------------------------------------------------------------
# pallas_call wrappers
# --------------------------------------------------------------------------
def conv1_pass(ap, wb, tile_h):
    N, hp2, wc = ap.shape
    H = hp2 - 2
    wf = wb.shape[1]
    nt = H // tile_h
    return pl.pallas_call(
        conv1_stats_kernel,
        grid=(N, nt),
        in_specs=[
            pl.BlockSpec((1, hp2, wc), lambda n, t: (n, 0, 0)),      # resident per image
            pl.BlockSpec((3 * wc, wf), lambda n, t: (0, 0)),         # resident weights
        ],
        out_specs=[
            pl.BlockSpec((1, tile_h, wf), lambda n, t: (n, t, 0)),
            pl.BlockSpec((1, 1, 2, wf), lambda n, t: (n, t, 0, 0)),  # per-tile partials
        ],
        out_shape=[
            jax.ShapeDtypeStruct((N, H, wf), jnp.bfloat16),
            jax.ShapeDtypeStruct((N, nt, 2, wf), jnp.float32),
        ],
        compiler_params=pltpu.CompilerParams(
            dimension_semantics=("parallel", "parallel")),
    )(ap, wb)


def conv2_pass(y1, sc, sh, wb, tile_h):
    N, H, wf_in = y1.shape
    wf_out = wb.shape[1]
    nt = H // tile_h
    return pl.pallas_call(
        conv2_fused_kernel,
        grid=(N, nt),
        in_specs=[
            pl.BlockSpec((1, H, wf_in), lambda n, t: (n, 0, 0)),     # resident per image
            pl.BlockSpec((1, wf_in), lambda n, t: (0, 0)),
            pl.BlockSpec((1, wf_in), lambda n, t: (0, 0)),
            pl.BlockSpec((3 * wf_in, wf_out), lambda n, t: (0, 0)),
        ],
        out_specs=[
            pl.BlockSpec((1, tile_h, wf_out), lambda n, t: (n, t, 0)),
            pl.BlockSpec((1, 1, 2, wf_out), lambda n, t: (n, t, 0, 0)),
        ],
        out_shape=[
            jax.ShapeDtypeStruct((N, H, wf_out), jnp.bfloat16),
            jax.ShapeDtypeStruct((N, nt, 2, wf_out), jnp.float32),
        ],
        # TODO(synk): for large H on v7x (64 MiB VMEM) the per-image resident
        # slab + scratch should be replaced by streamed halo windows.
        scratch_shapes=[pltpu.VMEM((H + 2, wf_in), jnp.float32)],
        compiler_params=pltpu.CompilerParams(
            dimension_semantics=("parallel", "arbitrary")),          # prologue scratch -> t sequential
    )(y1, sc, sh, wb)


def bn_relu_pool_pass(y, scale, shift, sel, tile_h, F):
    """BN2 + ReLU (skip output) with fused 2x2 stride-2 max pool."""
    N, H, wf = y.shape
    pwf = sel.shape[1]  # (W//2)*F  (multiple of 128 at real sizes -> lane-dense store)
    nt = H // tile_h

    def kernel(y_ref, sc_ref, sh_ref, sel_ref, skip_ref, pool_ref):
        a = jnp.maximum(y_ref[0].astype(jnp.float32) * sc_ref[...] + sh_ref[...], 0.0)
        skip_ref[0] = a.astype(skip_ref.dtype)
        th = a.shape[0]
        # Column-neighbour max via a lane shift (rotation by F lanes), then
        # row-pair max; a single 0/1 even-group selection matmul (f32, so the
        # pooled values match the stored skip) does the column subsample.
        a_next = jnp.concatenate([a[:, F:], a[:, :F]], axis=-1)
        c = jnp.maximum(a, a_next)
        r = jnp.max(c.reshape(th // 2, 2, c.shape[1]), axis=1)
        pool_ref[0] = jnp.dot(r, sel_ref[...],
                              preferred_element_type=jnp.float32).astype(pool_ref.dtype)

    return pl.pallas_call(
        kernel,
        grid=(N, nt),
        in_specs=[
            pl.BlockSpec((1, tile_h, wf), lambda n, t: (n, t, 0)),
            pl.BlockSpec((1, wf), lambda n, t: (0, 0)),
            pl.BlockSpec((1, wf), lambda n, t: (0, 0)),
            pl.BlockSpec((wf, pwf), lambda n, t: (0, 0)),
        ],
        out_specs=[
            pl.BlockSpec((1, tile_h, wf), lambda n, t: (n, t, 0)),
            pl.BlockSpec((1, tile_h // 2, pwf), lambda n, t: (n, t, 0)),
        ],
        out_shape=[
            jax.ShapeDtypeStruct((N, H, wf), jnp.float32),
            jax.ShapeDtypeStruct((N, H // 2, pwf), jnp.float32),
        ],
        compiler_params=pltpu.CompilerParams(
            dimension_semantics=("parallel", "parallel")),
    )(y, scale, shift, sel)


def bn_relu_pass(y, scale, shift, tile_h):
    """BN2 + ReLU only (max_pooling=False path)."""
    N, H, wf = y.shape
    nt = H // tile_h

    def kernel(y_ref, sc_ref, sh_ref, o_ref):
        a = jnp.maximum(y_ref[0].astype(jnp.float32) * sc_ref[...] + sh_ref[...], 0.0)
        o_ref[0] = a.astype(o_ref.dtype)

    return pl.pallas_call(
        kernel,
        grid=(N, nt),
        in_specs=[
            pl.BlockSpec((1, tile_h, wf), lambda n, t: (n, t, 0)),
            pl.BlockSpec((1, wf), lambda n, t: (0, 0)),
            pl.BlockSpec((1, wf), lambda n, t: (0, 0)),
        ],
        out_specs=pl.BlockSpec((1, tile_h, wf), lambda n, t: (n, t, 0)),
        out_shape=jax.ShapeDtypeStruct((N, H, wf), jnp.float32),
        compiler_params=pltpu.CompilerParams(
            dimension_semantics=("parallel", "parallel")),
    )(y, scale, shift)


# --------------------------------------------------------------------------
# Host-side glue: layout prep, banded weights, BN folding (all tiny ops)
# --------------------------------------------------------------------------
def _pick_tile_h(H):
    # Largest row tile (multiple of 16 so the pooled tile height stays a
    # multiple of 8) that divides H, capped at 512 rows.
    for th in (512, 256, 128, 64, 32, 16):
        if H % th == 0:
            return th
    raise ValueError("H must be a multiple of 16 for this kernel")


def build_banded_weights(w_fchw, W):
    """PyTorch conv weight (F, C, 3, 3) -> banded matrix (3*W*C, W*F).

    The W 'same' zero-boundary is baked in (out-of-range column taps dropped)
    and the 3 row taps are concatenated along the contraction dim, so the conv
    is a single MXU matmul per row tile (only a 2-row H halo is needed).
    """
    Fn, C, KH, KW = w_fchw.shape
    K = jnp.transpose(w_fchw.astype(jnp.float32), (2, 3, 1, 0))     # (dy, dx, c, f)
    wi = jnp.arange(W)[None, :, None]
    wo = jnp.arange(W)[None, None, :]
    dx = jnp.arange(KW)[:, None, None]
    B = (wi == wo + dx - 1).astype(jnp.float32)                     # (dx, wi, wo)
    M = jnp.einsum("xiw,yxcf->yicwf", B, K)                         # (dy, wi, c, wo, f)
    return M.reshape(KH * W * C, W * Fn).astype(jnp.bfloat16)


def build_pool_selector(W, F):
    """0/1 matrix picking the even W-groups of F lanes (column subsample)."""
    out = jnp.arange((W // 2) * F)
    src = (out // F) * 2 * F + (out % F)
    lane = jnp.arange(W * F)[:, None]
    return (lane == src[None, :]).astype(jnp.float32)               # (W*F, (W//2)*F)


def fold_stats(stats, W, F, count):
    """(N, nt, 2, W*F) per-tile [sum, sumsq] -> per-channel mean / biased var."""
    s = stats.sum(axis=(0, 1)).reshape(2, W, F).sum(axis=1)         # (2, F)
    mean = s[0] / count
    var = jnp.maximum(s[1] / count - mean * mean, 0.0)
    return mean, var


def bn_lane_params(mean, var, gamma, beta, W):
    scale = gamma.astype(jnp.float32) * jax.lax.rsqrt(var + EPS)
    shift = beta.astype(jnp.float32) - mean * scale
    Fn = mean.shape[0]
    return (jnp.tile(scale, W).reshape(1, W * Fn),
            jnp.tile(shift, W).reshape(1, W * Fn))


def conv_block_forward(x_nchw, params, max_pooling=True):
    """Equivalent of ConvBlock.forward; returns (next_layer, skip) in NCHW."""
    N, C, H, W = x_nchw.shape
    F = params["w1"].shape[0]
    tile_h = _pick_tile_h(H)

    # Input: NCHW -> NHWC, zero H halo, flatten (W, C) into the lane axis, bf16.
    x = jnp.transpose(x_nchw, (0, 2, 3, 1))
    ap1 = jnp.pad(x, ((0, 0), (1, 1), (0, 0), (0, 0))) \
             .reshape(N, H + 2, W * C).astype(jnp.bfloat16)

    # conv1 (+stats).  Conv bias is omitted: training-mode BN's mean
    # subtraction cancels it exactly.
    wb1 = build_banded_weights(params["w1"], W)
    y1, st1 = conv1_pass(ap1, wb1, tile_h)
    m1, v1 = fold_stats(st1, W, F, N * H * W)
    sc1, sh1 = bn_lane_params(m1, v1, params["g1"], params["be1"], W)

    # conv2 with BN1+ReLU+padding fused into its prologue (+stats for BN2).
    wb2 = build_banded_weights(params["w2"], W)
    y2, st2 = conv2_pass(y1, sc1, sh1, wb2, tile_h)
    m2, v2 = fold_stats(st2, W, F, N * H * W)
    sc2, sh2 = bn_lane_params(m2, v2, params["g2"], params["be2"], W)

    # TODO(synk): dropout_prob > 0 path (nn.Dropout) not implemented.
    if max_pooling:
        sel = build_pool_selector(W, F)
        skip_flat, pool_flat = bn_relu_pool_pass(y2, sc2, sh2, sel, tile_h, F)
        skip = jnp.transpose(skip_flat.reshape(N, H, W, F), (0, 3, 1, 2))
        nxt = jnp.transpose(pool_flat.reshape(N, H // 2, W // 2, F), (0, 3, 1, 2))
    else:
        skip_flat = bn_relu_pass(y2, sc2, sh2, tile_h)
        skip = jnp.transpose(skip_flat.reshape(N, H, W, F), (0, 3, 1, 2))
        nxt = skip
    return nxt, skip


# --------------------------------------------------------------------------
# Pure-JAX reference (mirrors PyTorch forward in training mode, f32, with bias)
# --------------------------------------------------------------------------
def reference_forward(x, params):
    def conv(h, w, b):
        y = jax.lax.conv_general_dilated(
            h, w, (1, 1), "SAME",
            dimension_numbers=("NCHW", "OIHW", "NCHW"),
            precision=jax.lax.Precision.HIGHEST)
        return y + b[None, :, None, None]

    def bn(h, g, be):
        mean = h.mean(axis=(0, 2, 3), keepdims=True)
        var = jnp.square(h - mean).mean(axis=(0, 2, 3), keepdims=True)
        return (h - mean) * jax.lax.rsqrt(var + EPS) * g[None, :, None, None] \
            + be[None, :, None, None]

    h = jax.nn.relu(bn(conv(x, params["w1"], params["b1"]), params["g1"], params["be1"]))
    h = jax.nn.relu(bn(conv(h, params["w2"], params["b2"]), params["g2"], params["be2"]))
    N, C, H, W = h.shape
    pooled = h.reshape(N, C, H // 2, 2, W // 2, 2).max(axis=(3, 5))
    return pooled, h


# --------------------------------------------------------------------------
if __name__ == "__main__":
    key = jax.random.PRNGKey(0)
    kx, k1, k2, k3, k4, k5, k6, k7, k8 = jax.random.split(key, 9)

    N, C_IN, H, W = 2, 4, 16, 16
    F = 8  # n_filters

    x = jax.random.normal(kx, (N, C_IN, H, W), dtype=jnp.float32)

    params = {
        "w1": 0.1 * jax.random.normal(k1, (F, C_IN, 3, 3), dtype=jnp.float32),
        "b1": 0.1 * jax.random.normal(k2, (F,), dtype=jnp.float32),
        "g1": 1.0 + 0.1 * jax.random.normal(k3, (F,), dtype=jnp.float32),
        "be1": 0.1 * jax.random.normal(k4, (F,), dtype=jnp.float32),
        "w2": 0.1 * jax.random.normal(k5, (F, F, 3, 3), dtype=jnp.float32),
        "b2": 0.1 * jax.random.normal(k6, (F,), dtype=jnp.float32),
        "g2": 1.0 + 0.1 * jax.random.normal(k7, (F,), dtype=jnp.float32),
        "be2": 0.1 * jax.random.normal(k8, (F,), dtype=jnp.float32),
    }

    next_layer, skip = conv_block_forward(x, params, max_pooling=True)
    next_layer = jax.block_until_ready(next_layer)
    skip = jax.block_until_ready(skip)

    ref_next, ref_skip = reference_forward(x, params)

    assert next_layer.shape == (N, F, H // 2, W // 2), next_layer.shape
    assert skip.shape == (N, F, H, W), skip.shape
    # bf16 MXU inputs/weights + bf16 y1/y2 intermediates vs. an f32 HIGHEST
    # reference across two conv+BN layers -> a few e-3 typical, 2.5e-2 bound.
    np.testing.assert_allclose(np.asarray(skip), np.asarray(ref_skip),
                               rtol=2.5e-2, atol=2.5e-2)
    np.testing.assert_allclose(np.asarray(next_layer), np.asarray(ref_next),
                               rtol=2.5e-2, atol=2.5e-2)

    print("KERNEL_OK")
</pallas_src>

<mosaic_0001>
module attributes {stable_mosaic.version = 11 : i64} {
  func.func @conv1_stats_kernel(%arg0: i32, %arg1: i32, %arg2: memref<1x18x64xbf16, #tpu.memory_space<vmem>>, %arg3: memref<192x128xbf16, #tpu.memory_space<vmem>>, %arg4: memref<1x16x128xbf16, #tpu.memory_space<vmem>>, %arg5: memref<1x1x2x128xf32, #tpu.memory_space<vmem>>) attributes {dimension_semantics = [#tpu.dimension_semantics<parallel>, #tpu.dimension_semantics<parallel>], iteration_bounds = array<i64: 2, 1>, scalar_prefetch = 0 : i64, scratch_operands = 0 : i64, tpu.core_type = #tpu.core_type<tc>, window_params = [{transform_indices = @transform_0, window_bounds = array<i64: 1, 18, 64>}, {pipeline_mode = #tpu.pipeline_mode<synchronous>, transform_indices = @transform_1, window_bounds = array<i64: 192, 128>}, {transform_indices = @transform_2, window_bounds = array<i64: 1, 16, 128>}, {transform_indices = @transform_3, window_bounds = array<i64: 1, 1, 2, 128>}]} {
    %c16_i32 = arith.constant 16 : i32
    %0 = arith.muli %arg1, %c16_i32 : i32
    %1 = tpu.assume_multiple %0, 16 : i32
    %c0 = arith.constant 0 : index
    %2 = arith.index_cast %1 : i32 to index
    %c0_0 = arith.constant 0 : index
    %3 = vector.load %arg2[%c0, %2, %c0_0] : memref<1x18x64xbf16, #tpu.memory_space<vmem>>, vector<1x18x64xbf16>
    %4 = vector.shape_cast %3 : vector<1x18x64xbf16> to vector<18x64xbf16>
    %5 = arith.extf %4 : vector<18x64xbf16> to vector<18x64xf32>
    %6 = vector.extract_strided_slice %5 {offsets = [0, 0], sizes = [16, 64], strides = [1, 1]} : vector<18x64xf32> to vector<16x64xf32>
    %7 = vector.extract_strided_slice %5 {offsets = [1, 0], sizes = [16, 64], strides = [1, 1]} : vector<18x64xf32> to vector<16x64xf32>
    %8 = vector.extract_strided_slice %5 {offsets = [2, 0], sizes = [16, 64], strides = [1, 1]} : vector<18x64xf32> to vector<16x64xf32>
    %9 = tpu.concatenate %6, %7, %8 in 1 : vector<16x64xf32>, vector<16x64xf32>, vector<16x64xf32> -> vector<16x192xf32>
    %10 = arith.truncf %9 : vector<16x192xf32> to vector<16x192xbf16>
    %c0_1 = arith.constant 0 : index
    %c0_2 = arith.constant 0 : index
    %11 = vector.load %arg3[%c0_1, %c0_2] : memref<192x128xbf16, #tpu.memory_space<vmem>>, vector<192x128xbf16>
    %cst = arith.constant dense<0.000000e+00> : vector<16x128xf32>
    %12 = tpu.matmul %10, %11, %cst {dimension_numbers = #tpu.dot_dimension_numbers<[1], [0], [0], [1], [0, 0, 1, 1], [], []>} : vector<16x192xbf16>, vector<192x128xbf16>, vector<16x128xf32> -> vector<16x128xf32>
    %13 = arith.truncf %12 : vector<16x128xf32> to vector<16x128xbf16>
    %c0_3 = arith.constant 0 : index
    %c0_4 = arith.constant 0 : index
    %c0_5 = arith.constant 0 : index
    %14 = vector.load %arg4[%c0_3, %c0_4, %c0_5] : memref<1x16x128xbf16, #tpu.memory_space<vmem>>, vector<1x16x128xbf16>
    %15 = vector.shape_cast %14 : vector<1x16x128xbf16> to vector<16x128xbf16>
    %16 = vector.shape_cast %13 : vector<16x128xbf16> to vector<1x16x128xbf16>
    tpu.vector_store %arg4[%c0_3, %c0_4, %c0_5], %16 {strides = array<i32>} : memref<1x16x128xbf16, #tpu.memory_space<vmem>>, vector<1x16x128xbf16>,
    %cst_6 = arith.constant dense<0.000000e+00> : vector<128xf32>
    %17 = vector.multi_reduction <add>, %12, %cst_6 [0] : vector<16x128xf32> to vector<128xf32>
    %18 = vector.shape_cast %17 : vector<128xf32> to vector<1x128xf32>
    %19 = arith.mulf %12, %12 : vector<16x128xf32>
    %cst_7 = arith.constant dense<0.000000e+00> : vector<128xf32>
    %20 = vector.multi_reduction <add>, %19, %cst_7 [0] : vector<16x128xf32> to vector<128xf32>
    %21 = vector.shape_cast %20 : vector<128xf32> to vector<1x128xf32>
    %22 = tpu.concatenate %18, %21 in 0 : vector<1x128xf32>, vector<1x128xf32> -> vector<2x128xf32>
    %c0_8 = arith.constant 0 : index
    %c0_9 = arith.constant 0 : index
    %c0_10 = arith.constant 0 : index
    %c0_11 = arith.constant 0 : index
    %23 = vector.load %arg5[%c0_8, %c0_9, %c0_10, %c0_11] : memref<1x1x2x128xf32, #tpu.memory_space<vmem>>, vector<1x1x2x128xf32>
    %24 = vector.shape_cast %23 : vector<1x1x2x128xf32> to vector<2x128xf32>
    %25 = vector.shape_cast %22 : vector<2x128xf32> to vector<1x1x2x128xf32>
    tpu.vector_store %arg5[%c0_8, %c0_9, %c0_10, %c0_11], %25 {strides = array<i32>} : memref<1x1x2x128xf32, #tpu.memory_space<vmem>>, vector<1x1x2x128xf32>,
    return
  }
  func.func @transform_0(%arg0: i32, %arg1: i32) -> (i32, i32, i32) {
    %c0_i32 = arith.constant 0 : i32
    %c0_i32_0 = arith.constant 0 : i32
    %c0_i32_1 = arith.constant 0 : i32
    return %arg0, %c0_i32, %c0_i32_0 : i32, i32, i32
  }
  func.func @transform_1(%arg0: i32, %arg1: i32) -> (i32, i32) {
    %c0_i32 = arith.constant 0 : i32
    %c0_i32_0 = arith.constant 0 : i32
    %c0_i32_1 = arith.constant 0 : i32
    return %c0_i32, %c0_i32_0 : i32, i32
  }
  func.func @transform_2(%arg0: i32, %arg1: i32) -> (i32, i32, i32) {
    %c0_i32 = arith.constant 0 : i32
    %c0_i32_0 = arith.constant 0 : i32
    return %arg0, %arg1, %c0_i32 : i32, i32, i32
  }
  func.func @transform_3(%arg0: i32, %arg1: i32) -> (i32, i32, i32, i32) {
    %c0_i32 = arith.constant 0 : i32
    %c0_i32_0 = arith.constant 0 : i32
    %c0_i32_1 = arith.constant 0 : i32
    return %arg0, %arg1, %c0_i32, %c0_i32_0 : i32, i32, i32, i32
  }
}

</mosaic_0001>

<llo_original>
// kernel: tpu_custom_call.1
$region0: #{tpu_custom_call.1}
  #allocation0 [shape = 'u32[]', space=smem, size = 0x4, offset = 0x4, fixed_abs, tag = 'smem constant byte address 0x4 - core index']
  #allocation1 [shape = 'u32[72,128]{1,0:T(1,128)}', space=vmem, size = 0x9000, scoped, tag = 'internal scratch']
  %s0 = inlined_call_operand.vmem [shape: bf16[2,18,64], index: 0, kind: input, shape index: {}]
  %s1 = inlined_call_operand.hbm [shape: bf16[192,128], index: 1, kind: input, shape index: {}]
  %s2 = inlined_call_operand.hbm [shape: bf16[2,16,128], index: 2, kind: output, shape index: {0}]
  %s3 = inlined_call_operand.hbm [shape: f32[2,1,2,128], index: 3, kind: output, shape index: {1}]
  %4 = xla_tuple %s2, %s3
  %s5 = sld [smem:[#allocation0]]
  $region53: #{tpu_custom_call.1} parent=0
    _
  %s7 = ssub.s32 1, %s5
  %s8 = scalar_select 0, %s7, %s5
  $region1: #{tpu_custom_call.1} parent=0
    #allocation2 [shape = 'u8[49152]{0}', space=vmem, size = 0xc000, scoped, tag = 'input window, operand 1, single buffered']
    #allocation3 [shape = 's32[2]{0}', space=sflag, size = 0x8, scoped, tag = 'scoped memory for tpu_custom_call.1']
    #allocation4 [shape = 's32[2]{0}', space=sflag, size = 0x8, scoped, tag = 'scoped memory for tpu_custom_call.1']
    #allocation5 [shape = 'u8[8192]{0}', space=vmem, size = 0x2000, scoped, tag = 'output window, operand 0']
    #allocation6 [shape = 'u8[2048]{0}', space=vmem, size = 0x800, scoped, tag = 'output window, operand 1']
    #allocation7 [shape = 's32[2]{0}', space=sflag, size = 0x8, scoped, tag = 'scoped memory for tpu_custom_call.1']
    %9 = vsyncpa [#allocation3], 0
    %10 = vsyncpa [#allocation4], 0
    %s11 = scalar_lea.sflag [#allocation4], 1
    %12 = vsyncpa %s11, 0
    %13 = vsyncpa [#allocation7], 0
    %s14 = scalar_lea.sflag [#allocation7], 1
    %15 = vsyncpa %s14, 0
    loop: start=0, step=1, limit=4
    $region2: #{tpu_custom_call.1} parent=1 // loop_pre_header
      _
    $region3: #{tpu_custom_call.1} parent=1 // loop_header
      %s17 = sphi 0, %s21
      %p18 = scmp.ge.s32.totalorder %s17, 4
      %s24 = sphi 0, %s36
      %s25 = sphi 0, %s32
      %s26 = sphi 0, %s24
      %s27 = sphi 0, %s25
      %s28 = sphi 0, %s26
      %s29 = sphi 0, %s27
      %s39 = sphi 0, %s41
      %s42 = sphi 0, %s39
      %s43 = sphi 0, %s42
      %s59 = sphi 0, %s43
      %s63 = sphi 0, %s63
      %s65 = sphi 0, %s63
      %s66 = sphi 0, %s65
      %s80 = sphi 0, %s66
      %s88 = sphi 0, %s90
      %s91 = sphi 0, %s88
      %s92 = sphi 0, %s91
      %s108 = sphi 0, %s92
      %s116 = sphi 0, %s118
      %s119 = sphi 0, %s116
      %s120 = sphi 0, %s119
      %s136 = sphi 0, %s120
    $region4: #{tpu_custom_call.1} parent=1 // loop_header_branch
      %20 = sbr.rel (%p18) target = $region8
    $region5: #{tpu_custom_call.1} parent=1 // loop_body
      %s22 = ssub.s32 %s17, 1
      %s23 = ssub.s32 %s17, 2
      %s30 = sadd.s32 1, %s25
      %p31 = scmp.ge.s32.totalorder %s30, 1
      %s32 = scalar_select %p31, 0, %s30
      %s33 = sadd.s32 1, %s24
      %s34 = scalar_select %p31, %s33, %s24
      %p35 = scmp.ge.s32.totalorder %s34, 2
      %s36 = scalar_select %p35, 0, %s34
      %s37 = ssub.s32 %s24, %s36
      %p38 = scmp.eq.s32.totalorder %s37, 0
      %s40 = sadd.s32 %s39, 1
      %s41 = scalar_select %p38, %s39, %s40
      %p44 = pneg %p38
      %p45 = scmp.eq.s32.totalorder %s17, 1
      %p46 = por %p44, %p45
      %p47 = scmp.ne.s32.totalorder %s39, %s42
      %p48 = scmp.eq.s32.totalorder %s17, 0
      %p49 = por %p47, %p48
      %p50 = scmp.ne.s32.totalorder %s39, %s42
      %p51 = scmp.eq.s32.totalorder %s22, 1
      %p52 = por %p50, %p51
      %p53 = scmp.ne.s32.totalorder %s42, %s43
      %p54 = scmp.eq.s32.totalorder %s22, 0
      %p55 = por %p53, %p54
      %p56 = scmp.ne.s32.totalorder %s42, %s43
      %p57 = scmp.eq.s32.totalorder %s23, 1
      %p58 = por %p56, %p57
      %p60 = scmp.ne.s32.totalorder %s43, %s59
      %p61 = scmp.eq.s32.totalorder %s23, 0
      %p62 = por %p60, %p61
      %s64 = sadd.s32 %s63, 1
      %p67 = scmp.eq.s32.totalorder %s17, 1
      %p68 = scmp.ne.s32.totalorder %s63, %s65
      %p69 = scmp.eq.s32.totalorder %s17, 0
      %p70 = por %p68, %p69
      %p71 = scmp.ne.s32.totalorder %s63, %s65
      %p72 = scmp.eq.s32.totalorder %s22, 1
      %p73 = por %p71, %p72
      %p74 = scmp.ne.s32.totalorder %s65, %s66
      %p75 = scmp.eq.s32.totalorder %s22, 0
      %p76 = por %p74, %p75
      %p77 = scmp.ne.s32.totalorder %s65, %s66
      %p78 = scmp.eq.s32.totalorder %s23, 1
      %p79 = por %p77, %p78
      %p81 = scmp.ne.s32.totalorder %s66, %s80
      %p82 = scmp.eq.s32.totalorder %s23, 0
      %p83 = por %p81, %p82
      %s84 = ssub.s32 %s24, %s36
      %s85 = ssub.s32 %s25, %s32
      %s86 = sor.u32 %s84, %s85
      %p87 = scmp.eq.s32.totalorder %s86, 0
      %s89 = sadd.s32 %s88, 1
      %s90 = scalar_select %p87, %s88, %s89
      %p93 = pneg %p87
      %p94 = scmp.eq.s32.totalorder %s17, 1
      %p95 = por %p93, %p94
      %p96 = scmp.ne.s32.totalorder %s88, %s91
      %p97 = scmp.eq.s32.totalorder %s17, 0
      %p98 = por %p96, %p97
      %p99 = scmp.ne.s32.totalorder %s88, %s91
      %p100 = scmp.eq.s32.totalorder %s22, 1
      %p101 = por %p99, %p100
      %p102 = scmp.ne.s32.totalorder %s91, %s92
      %p103 = scmp.eq.s32.totalorder %s22, 0
      %p104 = por %p102, %p103
      %p105 = scmp.ne.s32.totalorder %s91, %s92
      %p106 = scmp.eq.s32.totalorder %s23, 1
      %p107 = por %p105, %p106
      %p109 = scmp.ne.s32.totalorder %s92, %s108
      %p110 = scmp.eq.s32.totalorder %s23, 0
      %p111 = por %p109, %p110
      %s112 = ssub.s32 %s24, %s36
      %s113 = ssub.s32 %s25, %s32
      %s114 = sor.u32 %s112, %s113
      %p115 = scmp.eq.s32.totalorder %s114, 0
      %s117 = sadd.s32 %s116, 1
      %s118 = scalar_select %p115, %s116, %s117
      %p121 = pneg %p115
      %p122 = scmp.eq.s32.totalorder %s17, 1
      %p123 = por %p121, %p122
      %p124 = scmp.ne.s32.totalorder %s116, %s119
      %p125 = scmp.eq.s32.totalorder %s17, 0
      %p126 = por %p124, %p125
      %p127 = scmp.ne.s32.totalorder %s116, %s119
      %p128 = scmp.eq.s32.totalorder %s22, 1
      %p129 = por %p127, %p128
      %p130 = scmp.ne.s32.totalorder %s119, %s120
      %p131 = scmp.eq.s32.totalorder %s22, 0
      %p132 = por %p130, %p131
      %p133 = scmp.ne.s32.totalorder %s119, %s120
      %p134 = scmp.eq.s32.totalorder %s23, 1
      %p135 = por %p133, %p134
      %p137 = scmp.ne.s32.totalorder %s120, %s136
      %p138 = scmp.eq.s32.totalorder %s23, 0
      %p139 = por %p137, %p138
      %p140 = scmp.le.s32.totalorder 1, %s17
      %p141 = scmp.lt.s32.totalorder %s17, 3
      %p142 = pnand %p140, %p141
      %p143 = pneg %p142
      // Predicated region
      $region9: #{tpu_custom_call.1} parent=5 // pred_check
        _
      $region10: #{tpu_custom_call.1} parent=5 // pred_check_branch
        %145 = sbr.rel (%p142) target = $region12
      $region11: #{tpu_custom_call.1} parent=5 // pred_region
        %s146 = ssub.s32 %s17, 1
        // Predicated region
        $region13: #{tpu_custom_call.1} parent=11 // pred_check
          %p147 = pneg %p76
        $region14: #{tpu_custom_call.1} parent=11 // pred_check_branch
          %149 = sbr.rel (%p147) target = $region16
        $region15: #{tpu_custom_call.1} parent=11 // pred_region
          %151 = vsyncadd [#allocation3], 0
          %s152 = sshll.u32 %s1, 4
          %s153 = int_to_ptr.hbm [resolvable:$true] %s152
          %s154 = sshll.u32 [#allocation2], 4
          %s155 = int_to_ptr.vmem [resolvable:$true] %s154
          %160 = dma.hbm_to_vmem [thread:$0]  %s153, 1536, %s155, [#allocation3], 64, 64, 4
        $region16: #{tpu_custom_call.1} parent=11 // pred_fallthru
          _
      $region12: #{tpu_custom_call.1} parent=5 // pred_fallthru
        _
      %p161 = scmp.lt.s32.totalorder %s17, 2
      // Predicated region
      $region17: #{tpu_custom_call.1} parent=5 // pred_check
        %p162 = pneg %p161
      $region18: #{tpu_custom_call.1} parent=5 // pred_check_branch
        %164 = sbr.rel (%p162) target = $region20
      $region19: #{tpu_custom_call.1} parent=5 // pred_region
        // Predicated region
        $region21: #{tpu_custom_call.1} parent=19 // pred_check
          %p165 = pneg %p49
        $region22: #{tpu_custom_call.1} parent=19 // pred_check_branch
          %167 = sbr.rel (%p165) target = $region24
        $region23: #{tpu_custom_call.1} parent=19 // pred_region
          %p168 = scmp.lt.s32.totalorder %s24, 1
          %s169 = scalar_select %p168, %s24, 1
          %s170 = smul.addr %s169, 3
          %s171 = smul.addr %s170, 4
          %s172 = scalar_lea.vmem %s0, %s171
        $region24: #{tpu_custom_call.1} parent=19 // pred_fallthru
          _
      $region20: #{tpu_custom_call.1} parent=5 // pred_fallthru
        _
      %p173 = scmp.le.s32.totalorder 1, %s17
      %p174 = scmp.lt.s32.totalorder %s17, 3
      %p175 = pnand %p173, %p174
      %p176 = pneg %p175
      // Predicated region
      $region25: #{tpu_custom_call.1} parent=5 // pred_check
        _
      $region26: #{tpu_custom_call.1} parent=5 // pred_check_branch
        %178 = sbr.rel (%p175) target = $region28
      $region27: #{tpu_custom_call.1} parent=5 // pred_region
        %s179 = ssub.s32 %s17, 1
        // Predicated region
        $region29: #{tpu_custom_call.1} parent=27 // pred_check
          %p180 = pneg %p76
        $region30: #{tpu_custom_call.1} parent=27 // pred_check_branch
          %182 = sbr.rel (%p180) target = $region32
        $region31: #{tpu_custom_call.1} parent=27 // pred_region
          %184 = dma.done [#allocation3], 1536
        $region32: #{tpu_custom_call.1} parent=27 // pred_fallthru
          _
        %p185 = scmp.lt.s32.totalorder %s26, 1
        %s186 = scalar_select %p185, %s26, 1
        %s187 = smul.addr %s186, 3
        %s188 = smul.addr %s187, 4
        %s189 = scalar_lea.vmem %s0, %s188
        %p190 = pneg %p55
        %p191 = pneg %p52
        %p192 = pneg %p76
        %p193 = pneg %p73
        %p194 = pneg %p104
        %p195 = pneg %p101
        %s196 = sand.u32 %s91, 1
        %s197 = scalar_lea.sflag [#allocation4], %s196
        %s198 = sand.u32 %s91, 1
        %s199 = smul.addr %s198, 8
        %s200 = scalar_lea.vmem [#allocation5], %s199
        %p201 = pneg %p132
        %p202 = pneg %p129
        %s203 = sand.u32 %s119, 1
        %s204 = scalar_lea.sflag [#allocation7], %s203
        %s205 = sand.u32 %s119, 1
        %s206 = smul.addr %s205, 2
        %s207 = scalar_lea.vmem [#allocation6], %s206
        %p208 = scmp.lt.s32.totalorder %s26, 1
        %s209 = scalar_select %p208, %s26, 1
        %s210 = smul.addr %s209, 3
        %s211 = smul.addr %s210, 4
        %s212 = scalar_lea.vmem %s0, %s211
        %s213 = smul.u32 2, %s27
        %s215 = smul.u32 %s27, 16
        %s216 = sshra.s32 %s215, 3
        %s217 = sand.u32 %s215, 7
        %s218 = smul.addr %s216, 4
        %s219 = scalar_lea.vmem %s212, %s218
        %v220 = vld [vmem:[%s219] sm:$0xf]
        %v221 = vld [vmem:[%s219 + $0x4] sm:$0xf]
        %v222 = vld [vmem:[%s219 + $0x8] sm:$0x1]
        %v223 = vunpack.c.l.bf16 %v220
        %v224 = vunpack.c.l.bf16 %v221
        %v225 = vunpack.c.l.bf16 %v222
        %vm229 = vcmask 1046528
        %v230 = vrot.slane %v223, 1
        %v231 = vrot.slane %v224, 1
        %v232 = vsel %vm229, %v230, %v231
        %v233 = vrot.slane %v225, 1
        %v234 = vsel %vm229, %v231, %v233
        %235 = vrot.lane.b32.xlu0 %v232, 64
        %v236 = vpop.permute.xlu0 %235
        %237 = vrot.lane.b32.xlu0 %v234, 64
        %v238 = vpop.permute.xlu0 %237
        %vm241 = vcmask 1045504
        %v242 = vrot.slane %v223, 2
        %v243 = vrot.slane %v224, 2
        %v244 = vsel %vm241, %v242, %v243
        %v245 = vrot.slane %v225, 2
        %v246 = vsel %vm241, %v243, %v245
        %vm249 = vcmask 523264
        %v250 = vsel %vm249, %v223, %v236
        %v251 = vsel %vm249, %v224, %v238
        %v252 = vpack.c.bf16 %v251, %v250
        %v253 = vpack.c.bf16 %v246, %v244
        %v254 = vld [vmem:[#allocation2] sm:$0xf]
        %v255 = vld [vmem:[#allocation2 + $0x4] sm:$0xf]
        %v256 = vld [vmem:[#allocation2 + $0x8] sm:$0xf]
        %v257 = vld [vmem:[#allocation2 + $0xc] sm:$0xf]
        %v258 = vld [vmem:[#allocation2 + $0x10] sm:$0xf]
        %v259 = vld [vmem:[#allocation2 + $0x14] sm:$0xf]
        %v260 = vld [vmem:[#allocation2 + $0x18] sm:$0xf]
        %v261 = vld [vmem:[#allocation2 + $0x1c] sm:$0xf]
        %v262 = vld [vmem:[#allocation2 + $0x20] sm:$0xf]
        %v263 = vld [vmem:[#allocation2 + $0x24] sm:$0xf]
        %v264 = vld [vmem:[#allocation2 + $0x28] sm:$0xf]
        %v265 = vld [vmem:[#allocation2 + $0x2c] sm:$0xf]
        %v266 = vld [vmem:[#allocation2 + $0x30] sm:$0xf]
        %v267 = vld [vmem:[#allocation2 + $0x34] sm:$0xf]
        %v268 = vld [vmem:[#allocation2 + $0x38] sm:$0xf]
        %v269 = vld [vmem:[#allocation2 + $0x3c] sm:$0xf]
        %v270 = vld [vmem:[#allocation2 + $0x40] sm:$0xf]
        %v271 = vld [vmem:[#allocation2 + $0x44] sm:$0xf]
        %v272 = vld [vmem:[#allocation2 + $0x48] sm:$0xf]
        %v273 = vld [vmem:[#allocation2 + $0x4c] sm:$0xf]
        %v274 = vld [vmem:[#allocation2 + $0x50] sm:$0xf]
        %v275 = vld [vmem:[#allocation2 + $0x54] sm:$0xf]
        %v276 = vld [vmem:[#allocation2 + $0x58] sm:$0xf]
        %v277 = vld [vmem:[#allocation2 + $0x5c] sm:$0xf]
        %v302 = vunpack.c.l.b16 %v254
        %v303 = vunpack.c.l.b16 %v255
        %v304 = vunpack.c.l.b16 %v256
        %v305 = vunpack.c.l.b16 %v257
        %v306 = vunpack.c.l.b16 %v258
        %v307 = vunpack.c.l.b16 %v259
        %v308 = vunpack.c.l.b16 %v260
        %v309 = vunpack.c.l.b16 %v261
        %v310 = vunpack.c.l.b16 %v262
        %v311 = vunpack.c.l.b16 %v263
        %v312 = vunpack.c.l.b16 %v264
        %v313 = vunpack.c.l.b16 %v265
        %v314 = vunpack.c.l.b16 %v266
        %v315 = vunpack.c.l.b16 %v267
        %v316 = vunpack.c.l.b16 %v268
        %v317 = vunpack.c.l.b16 %v269
        %v318 = vunpack.c.l.b16 %v270
        %v319 = vunpack.c.l.b16 %v271
        %v320 = vunpack.c.l.b16 %v272
        %v321 = vunpack.c.l.b16 %v273
        %v322 = vunpack.c.l.b16 %v274
        %v323 = vunpack.c.l.b16 %v275
        %v324 = vunpack.c.l.b16 %v276
        %v325 = vunpack.c.l.b16 %v277
        %v326 = vpack.c.b16 %v303, %v302
        %v327 = vpack.c.b16 %v305, %v304
        %v328 = vpack.c.b16 %v307, %v306
        %v329 = vpack.c.b16 %v309, %v308
        %v330 = vpack.c.b16 %v311, %v310
        %v331 = vpack.c.b16 %v313, %v312
        %v332 = vpack.c.b16 %v315, %v314
        %v333 = vpack.c.b16 %v317, %v316
        %v334 = vpack.c.b16 %v319, %v318
        %v335 = vpack.c.b16 %v321, %v320
        %v336 = vpack.c.b16 %v323, %v322
        %v337 = vpack.c.b16 %v325, %v324
        %v351 = vsel %vm249, %v253, 0
        %353 = vmatpush.bf16.msra.mxu0 %v333
        %354 = vmatpush.bf16.msra.mxu0 %v332
        %355 = vmatpush.bf16.msra.mxu0 %v331
        %356 = vmatpush.bf16.msra.mxu0 %v330
        %357 = vmatpush.bf16.msra.mxu0 %v329
        %358 = vmatpush.bf16.msra.mxu0 %v328
        %359 = vmatpush.bf16.msra.mxu0 %v327
        %360 = vmatpush.bf16.msra.mxu0 %v326
        %361 = vmatmul.bf16.gmra.mxu0 %v252
        %v362 = vpop.f32.mrf.mxu0
        %v363 = vadd.f32 0.0, %v362
        %v364 = vpop.f32.mrf.mxu0
        %v365 = vadd.f32 0.0, %v364
        %366 = vdwg.mxu0
        %367 = vmatpush.bf16.msra.mxu0 0
        %368 = vmatpush.bf16.msra.mxu0 0
        %369 = vmatpush.bf16.msra.mxu0 0
        %370 = vmatpush.bf16.msra.mxu0 0
        %371 = vmatpush.bf16.msra.mxu0 %v337
        %372 = vmatpush.bf16.msra.mxu0 %v336
        %373 = vmatpush.bf16.msra.mxu0 %v335
        %374 = vmatpush.bf16.msra.mxu0 %v334
        %375 = vmatmul.bf16.gmra.mxu0 %v351
        %v376 = vpop.f32.mrf.mxu0
        %v377 = vadd.f32 %v363, %v376
        %v378 = vpop.f32.mrf.mxu0
        %v379 = vadd.f32 %v365, %v378
        %380 = vdwg.mxu0
        %v381 = vpack.c.bf16 %v377, %v377
        %v382 = vpack.c.bf16 %v379, %v379
        %383 = vst [vmem:[%s200] sm:$0xf] %v381
        %384 = vst [vmem:[%s200 + $0x4] sm:$0xf] %v382
        %v385 = vadd.f32 %v377, %v379
        %v386 = vrot.slane %v385, 4
        %v387 = vadd.f32 %v385, %v386
        %v388 = vrot.slane %v387, 2
        %v389 = vadd.f32 %v387, %v388
        %v390 = vrot.slane %v389, 1
        %v391 = vadd.f32 %v389, %v390
        %v392 = vmul.f32 %v377, %v377
        %v393 = vmul.f32 %v379, %v379
        %v394 = vadd.f32 %v392, %v393
        %v395 = vrot.slane %v394, 4
        %v396 = vadd.f32 %v394, %v395
        %v397 = vrot.slane %v396, 2
        %v398 = vadd.f32 %v396, %v397
        %v399 = vrot.slane %v398, 1
        %v400 = vadd.f32 %v398, %v399
        %vm401 = vcmask 1040384
        %v402 = vsel %vm401, %v391, %v400
        %403 = vst [vmem:[%s207] sm:$0x3] %v402
        %s404 = sand.u32 %s91, 1
        %s405 = scalar_lea.sflag [#allocation4], %s404
        %s406 = sand.u32 %s91, 1
        %s407 = smul.addr %s406, 8
        %s408 = scalar_lea.vmem [#allocation5], %s407
        %s409 = sand.u32 %s119, 1
        %s410 = scalar_lea.sflag [#allocation7], %s409
        %s411 = sand.u32 %s119, 1
        %s412 = smul.addr %s411, 2
        %s413 = scalar_lea.vmem [#allocation6], %s412
        // Predicated region
        $region33: #{tpu_custom_call.1} parent=27 // pred_check
          %p414 = pneg %p101
        $region34: #{tpu_custom_call.1} parent=27 // pred_check_branch
          %416 = sbr.rel (%p414) target = $region36
        $region35: #{tpu_custom_call.1} parent=27 // pred_region
          %s417 = smul.u32 2, %s27
          %419 = vsyncadd %s405, 0
          %s420 = smul.addr %s26, 2
          %s421 = sadd.s32 %s417, %s420
          %s422 = smul.addr %s421, 4
          %s423 = scalar_lea.hbm %s2, %s422
          %s424 = sshll.u32 %s408, 4
          %s425 = int_to_ptr.vmem [resolvable:$true] %s424
          %s426 = sshll.u32 %s423, 4
          %s427 = int_to_ptr.hbm [resolvable:$true] %s426
          %432 = dma.vmem_to_hbm [thread:$0]  %s425, 128, %s427, %s405, 64, 64, 4
        $region36: #{tpu_custom_call.1} parent=27 // pred_fallthru
          _
        // Predicated region
        $region37: #{tpu_custom_call.1} parent=27 // pred_check
          %p433 = pneg %p129
        $region38: #{tpu_custom_call.1} parent=27 // pred_check_branch
          %435 = sbr.rel (%p433) target = $region40
        $region39: #{tpu_custom_call.1} parent=27 // pred_region
          %437 = vsyncadd %s410, 0
          %s438 = sadd.s32 %s27, %s26
          %s439 = smul.addr %s438, 2
          %s440 = scalar_lea.hbm %s3, %s439
          %s442 = sshll.u32 %s413, 4
          %s443 = int_to_ptr.vmem [resolvable:$true] %s442
          %s444 = sshll.u32 %s440, 4
          %s445 = int_to_ptr.hbm [resolvable:$true] %s444
          %447 = dma.vmem_to_hbm [thread:$0]  %s443, 32, %s445, %s410
        $region40: #{tpu_custom_call.1} parent=27 // pred_fallthru
          _
      $region28: #{tpu_custom_call.1} parent=5 // pred_fallthru
        _
      %p448 = scmp.le.s32.totalorder 2, %s17
      // Predicated region
      $region41: #{tpu_custom_call.1} parent=5 // pred_check
        %p449 = pneg %p448
      $region42: #{tpu_custom_call.1} parent=5 // pred_check_branch
        %451 = sbr.rel (%p449) target = $region44
      $region43: #{tpu_custom_call.1} parent=5 // pred_region
        %s452 = ssub.s32 %s17, 2
        // Predicated region
        $region45: #{tpu_custom_call.1} parent=43 // pred_check
          %p453 = pneg %p107
        $region46: #{tpu_custom_call.1} parent=43 // pred_check_branch
          %455 = sbr.rel (%p453) target = $region48
        $region47: #{tpu_custom_call.1} parent=43 // pred_region
          %s456 = sand.u32 %s92, 1
          %s457 = scalar_lea.sflag [#allocation4], %s456
          %s458 = sand.u32 %s92, 1
          %s459 = smul.addr %s458, 8
          %s460 = scalar_lea.vmem [#allocation5], %s459
          %462 = dma.done %s457, 128
        $region48: #{tpu_custom_call.1} parent=43 // pred_fallthru
          _
        // Predicated region
        $region49: #{tpu_custom_call.1} parent=43 // pred_check
          %p463 = pneg %p135
        $region50: #{tpu_custom_call.1} parent=43 // pred_check_branch
          %465 = sbr.rel (%p463) target = $region52
        $region51: #{tpu_custom_call.1} parent=43 // pred_region
          %s466 = sand.u32 %s120, 1
          %s467 = scalar_lea.sflag [#allocation7], %s466
          %s468 = sand.u32 %s120, 1
          %s469 = smul.addr %s468, 2
          %s470 = scalar_lea.vmem [#allocation6], %s469
          %472 = dma.done %s467, 32
        $region52: #{tpu_custom_call.1} parent=43 // pred_fallthru
          _
      $region44: #{tpu_custom_call.1} parent=5 // pred_fallthru
        _
    $region6: #{tpu_custom_call.1} parent=1 // loop_footer
      %s21 = sadd.s32 1, %s17
    $region7: #{tpu_custom_call.1} parent=1 // loop_footer_branch
      %16 = sbr.rel target = $region3
    $region8: #{tpu_custom_call.1} parent=1 // loop_exit
      _
    %473 = vsyncpa [#allocation3], 1
    %s474 = scalar_lea.sflag [#allocation3], 1
    %475 = vsyncpa %s474, 1
    %476 = vsyncpa [#allocation4], 1
    %s477 = scalar_lea.sflag [#allocation4], 1
    %478 = vsyncpa %s477, 1
    %479 = vsyncpa [#allocation7], 1
    %s480 = scalar_lea.sflag [#allocation7], 1
    %481 = vsyncpa %s480, 1

</llo_original>
